<compile_context>
chip_gen: v7x
topology: tpu7x:2x2x1
jax: 0.10.0
libtpu: 0.0.40
codegen_flags: <defaults>
</compile_context>

<pallas_src>
import functools

import numpy as np

import jax
import jax.numpy as jnp
from jax.experimental import pallas as pl
from jax.experimental.pallas import tpu as pltpu

NUM_DIMENSIONS = 2   # matches `num_dimensions` in the PyTorch script
LANE = 128           # lane width of the packed parameter slab

# ----------------------------------------------------------------------------
# Row layout of the packed parameter slab (every entry lane-padded to 128).
# ----------------------------------------------------------------------------
ROW_LIN_W = 0                              # rows [0, D)     lin.weight^T  (D, D)
ROW_CONV_W = ROW_LIN_W + NUM_DIMENSIONS    # rows [2, 4)     conv.weight^T (D, D)
ROW_LIN_B = ROW_CONV_W + NUM_DIMENSIONS    # row 4           lin.bias      (1, D)
ROW_CONV_B = ROW_LIN_B + 1                 # row 5           conv.bias     (1, D)
ROW_GN_W = ROW_CONV_B + 1                  # row 6           GraphNorm weight
ROW_GN_B = ROW_GN_W + 1                    # row 7           GraphNorm bias
ROW_GN_MS = ROW_GN_B + 1                   # row 8           GraphNorm mean_scale
ROW_FC1_B = ROW_GN_MS + 1                  # row 9           fc1.bias      (1, H)
ROW_FC2_B = ROW_FC1_B + 1                  # row 10          fc2.bias      (1, D)
ROW_FC1_W = ROW_FC2_B + 1                  # rows [11, 13)   fc1.weight^T  (D, H)
ROW_FC2_W = 16                             # rows [16, 16+H) fc2.weight^T  (H, D)


# ----------------------------------------------------------------------------
# Pallas kernel: one grid step = the full forward pass for ONE graph instance.
# ----------------------------------------------------------------------------
def gmsnet_kernel(
    x_ref,        # (N, D)            node features of this instance
    a_ref,        # (N, N)            normalized adjacency (shared, DMA'd once)
    p_ref,        # (G, N)            mean-pooling matrix (shared, DMA'd once)
    prm_ref,      # (slab_rows, 128)  packed parameters (shared, DMA'd once)
    out_ref,      # (G, 128)          lane-dense output block (cols >= D are 0)
    *,
    eps_gn,
    eps_in,
    hidden,
):
    d = NUM_DIMENSIONS
    x = x_ref[...]                                            # (N, D)

    # ---- hoisted parameter loads (once, outside the unrolled FMA loops) ----
    lin_w = prm_ref[ROW_LIN_W:ROW_LIN_W + d, 0:d]             # (D, D)
    conv_w = prm_ref[ROW_CONV_W:ROW_CONV_W + d, 0:d]          # (D, D)
    fc1_w = prm_ref[ROW_FC1_W:ROW_FC1_W + d, 0:hidden]        # (D, H)
    lin_b = prm_ref[ROW_LIN_B:ROW_LIN_B + 1, 0:d]             # (1, D)
    conv_b = prm_ref[ROW_CONV_B:ROW_CONV_B + 1, 0:d]          # (1, D)
    fc1_b = prm_ref[ROW_FC1_B:ROW_FC1_B + 1, 0:hidden]        # (1, H)
    gn_w = prm_ref[ROW_GN_W:ROW_GN_W + 1, 0:d]
    gn_b = prm_ref[ROW_GN_B:ROW_GN_B + 1, 0:d]
    gn_ms = prm_ref[ROW_GN_MS:ROW_GN_MS + 1, 0:d]
    fc2_w_full = prm_ref[ROW_FC2_W:ROW_FC2_W + hidden, :]     # (H, 128) zero-padded
    fc2_b_full = prm_ref[ROW_FC2_B:ROW_FC2_B + 1, :]          # (1, 128) zero-padded

    # ---- x = self.lin(x): K = D = 2 contraction as VPU broadcast-FMAs ------
    h = lin_b
    for k in range(d):
        h = h + x[:, k:k + 1] * lin_w[k:k + 1, :]

    # ---- x = self.GNorm(x)  (GraphNorm, batch=None -> one graph) -----------
    mean = jnp.mean(h, axis=0, keepdims=True)
    centered = h - mean * gn_ms
    var = jnp.mean(centered * centered, axis=0, keepdims=True)
    h = gn_w * centered * jax.lax.rsqrt(var + eps_gn) + gn_b  # rsqrt -> EUP

    # ---- x = x.relu() -------------------------------------------------------
    h = jnp.maximum(h, 0.0)

    # ---- x = self.conv(x, edge_index) + x  (GCNConv + residual) ------------
    # message = h @ W (K = 2 -> VPU), aggregation = A_hat @ message (K = N -> MXU)
    msg = h[:, 0:1] * conv_w[0:1, :]
    for k in range(1, d):
        msg = msg + h[:, k:k + 1] * conv_w[k:k + 1, :]
    agg = jnp.dot(a_ref[...], msg, preferred_element_type=jnp.float32)
    h = agg + conv_b + h

    # ---- x = self.fc1(x)  (K = 2 -> VPU broadcast-FMAs) --------------------
    h1 = fc1_b
    for k in range(d):
        h1 = h1 + h[:, k:k + 1] * fc1_w[k:k + 1, :]

    # ---- x = self.ISNorm(x)  InstanceNorm1d on a 2-D (N, H) tensor:
    # PyTorch treats it as unbatched (C=N, L=H) -> per-row norm over H
    # (affine=False, biased variance).
    mu = jnp.mean(h1, axis=1, keepdims=True)
    dd = h1 - mu
    v = jnp.mean(dd * dd, axis=1, keepdims=True)
    h1 = dd * jax.lax.rsqrt(v + eps_in)

    # ---- scatter_mean fused BEFORE fc2 (pool rows sum to 1, fc2 is affine) --
    pooled = jnp.dot(p_ref[...], h1, preferred_element_type=jnp.float32)   # (G, H)

    # ---- x = self.fc2(x) on the pooled rows; lane-dense single-shot store --
    # fc2 weight/bias rows are zero-padded to 128 lanes in the slab, so this
    # produces the correct (G, D) result in columns [0, D) and zeros elsewhere.
    out = jnp.dot(pooled, fc2_w_full, preferred_element_type=jnp.float32) + fc2_b_full
    out_ref[...] = out.astype(out_ref.dtype)


# ----------------------------------------------------------------------------
# Host-side glue: graph structure -> dense operators, parameter packing
# (built ONCE per topology / weight set, outside the per-call path)
# ----------------------------------------------------------------------------
def build_gcn_adjacency(edge_index, num_nodes):
    """A_hat = D^-1/2 (A + I) D^-1/2 with A[dst, src] = 1 (source_to_target)."""
    a = np.zeros((num_nodes, num_nodes), np.float32)
    np.add.at(a, (edge_index[1], edge_index[0]), 1.0)
    a = a + np.eye(num_nodes, dtype=np.float32)      # add self loops
    deg = a.sum(axis=1)
    dinv = 1.0 / np.sqrt(np.maximum(deg, 1.0))
    return (dinv[:, None] * a * dinv[None, :]).astype(np.float32)


def build_mean_pool(batch, num_nodes, num_graphs):
    """P[g, n] = (batch[n] == g) / count_g  (scatter_mean as a matmul)."""
    onehot = (batch[None, :] == np.arange(num_graphs)[:, None]).astype(np.float32)
    counts = np.maximum(onehot.sum(axis=1, keepdims=True), 1.0)
    return (onehot / counts).astype(np.float32)


def pack_params(params, hidden):
    """Pack all small parameter tensors into one (rows, 128) f32 slab."""
    d = NUM_DIMENSIONS
    rows = ROW_FC2_W + hidden
    rows = ((rows + 7) // 8) * 8
    slab = np.zeros((rows, LANE), np.float32)
    slab[ROW_LIN_W:ROW_LIN_W + d, 0:d] = params["lin_w"]
    slab[ROW_CONV_W:ROW_CONV_W + d, 0:d] = params["conv_w"]
    slab[ROW_LIN_B:ROW_LIN_B + 1, 0:d] = params["lin_b"]
    slab[ROW_CONV_B:ROW_CONV_B + 1, 0:d] = params["conv_b"]
    slab[ROW_GN_W:ROW_GN_W + 1, 0:d] = params["gn_w"]
    slab[ROW_GN_B:ROW_GN_B + 1, 0:d] = params["gn_b"]
    slab[ROW_GN_MS:ROW_GN_MS + 1, 0:d] = params["gn_ms"]
    slab[ROW_FC1_B:ROW_FC1_B + 1, 0:hidden] = params["fc1_b"]
    slab[ROW_FC2_B:ROW_FC2_B + 1, 0:d] = params["fc2_b"]
    slab[ROW_FC1_W:ROW_FC1_W + d, 0:hidden] = params["fc1_w"]
    slab[ROW_FC2_W:ROW_FC2_W + hidden, 0:d] = params["fc2_w"]
    return jnp.asarray(slab)


def init_params(hidden_channels, key):
    """Deterministic synthetic parameters (shapes match the PyTorch module)."""
    d = NUM_DIMENSIONS
    ks = jax.random.split(key, 8)
    return {
        "lin_w": jax.random.normal(ks[0], (d, d), jnp.float32) * 0.5,
        "lin_b": jax.random.normal(ks[1], (1, d), jnp.float32) * 0.1,
        "gn_w": jnp.ones((1, d), jnp.float32),
        "gn_b": jnp.zeros((1, d), jnp.float32),
        "gn_ms": jnp.ones((1, d), jnp.float32),
        "conv_w": jax.random.normal(ks[2], (d, d), jnp.float32) * 0.5,
        "conv_b": jax.random.normal(ks[3], (1, d), jnp.float32) * 0.1,
        "fc1_w": jax.random.normal(ks[4], (d, hidden_channels), jnp.float32) * 0.5,
        "fc1_b": jax.random.normal(ks[5], (1, hidden_channels), jnp.float32) * 0.1,
        "fc2_w": jax.random.normal(ks[6], (hidden_channels, d), jnp.float32) * 0.5,
        "fc2_b": jax.random.normal(ks[7], (1, d), jnp.float32) * 0.1,
    }


def gmsnet_forward_batched(x_batched, a_hat, pool, param_slab, hidden_channels,
                           num_graphs):
    """x_batched: (B, N, D).  Returns (B, G, D)."""
    # NOTE: the reference module passes feature counts into the eps slots:
    # GraphNorm(num_dimensions, num_dimensions), InstanceNorm1d(hidden, hidden).
    # Reproduced literally here (eps_gn=2.0, eps_in=32.0).
    eps_gn = float(NUM_DIMENSIONS)
    eps_in = float(hidden_channels)

    b, n, d = x_batched.shape
    slab_rows = param_slab.shape[0]

    kernel = functools.partial(
        gmsnet_kernel, eps_gn=eps_gn, eps_in=eps_in, hidden=hidden_channels)

    # Rough resident estimate (double-buffered per-step blocks + shared blocks)
    # with generous headroom; everything here is tiny.
    est_bytes = 4 * (2 * n * d + 2 * num_graphs * LANE
                     + n * n + num_graphs * n + slab_rows * LANE)
    vmem_limit = max(4 * est_bytes, 4 * 1024 * 1024)

    out_padded = pl.pallas_call(
        kernel,
        out_shape=jax.ShapeDtypeStruct((b, num_graphs, LANE), jnp.float32),
        grid=(b,),
        in_specs=[
            # per-instance node features: one block per grid step
            pl.BlockSpec((None, n, d), lambda i: (i, 0, 0)),
            # shared operators / parameters: constant block index -> DMA'd once
            pl.BlockSpec((n, n), lambda i: (0, 0)),
            pl.BlockSpec((num_graphs, n), lambda i: (0, 0)),
            pl.BlockSpec((slab_rows, LANE), lambda i: (0, 0)),
        ],
        out_specs=pl.BlockSpec((None, num_graphs, LANE), lambda i: (i, 0, 0)),
        compiler_params=pltpu.CompilerParams(
            dimension_semantics=("parallel",),   # shards batch over v7x's 2 TCs
            vmem_limit_bytes=int(vmem_limit)),
    )(x_batched, a_hat, pool, param_slab)

    return out_padded[:, :, :NUM_DIMENSIONS]


# ----------------------------------------------------------------------------
# Pure-numpy reference (f32 accumulation, no MXU precision ambiguity)
# ----------------------------------------------------------------------------
def gmsnet_reference_np(x, a_hat, pool, params, hidden_channels):
    eps_gn = float(NUM_DIMENSIONS)
    eps_in = float(hidden_channels)
    p = {k: np.asarray(v, np.float32) for k, v in params.items()}

    h = x @ p["lin_w"] + p["lin_b"]
    mean = h.mean(axis=0, keepdims=True)
    c = h - mean * p["gn_ms"]
    var = (c * c).mean(axis=0, keepdims=True)
    h = p["gn_w"] * c / np.sqrt(var + eps_gn) + p["gn_b"]
    h = np.maximum(h, 0.0)
    h = a_hat @ (h @ p["conv_w"]) + p["conv_b"] + h
    h1 = h @ p["fc1_w"] + p["fc1_b"]
    mu = h1.mean(axis=1, keepdims=True)
    dd = h1 - mu
    v = (dd * dd).mean(axis=1, keepdims=True)
    h1 = dd / np.sqrt(v + eps_in)
    h2 = h1 @ p["fc2_w"] + p["fc2_b"]
    return pool @ h2


if __name__ == "__main__":
    hidden_channels = 32
    num_nodes = 8
    num_graphs = 2
    batch_size = 4   # independent graph instances processed in one pallas_call

    # Two ring graphs of 4 nodes each (directed edges in both directions).
    edges = []
    for base in (0, 4):
        ring = [(base + i, base + (i + 1) % 4) for i in range(4)]
        for s, t in ring:
            edges.append((s, t))
            edges.append((t, s))
    edge_index = np.array(edges, dtype=np.int32).T            # (2, 16)
    batch = np.array([0, 0, 0, 0, 1, 1, 1, 1], dtype=np.int32)

    key = jax.random.PRNGKey(0)
    kx, kp = jax.random.split(key)
    x_batched = jax.random.normal(
        kx, (batch_size, num_nodes, NUM_DIMENSIONS), jnp.float32)
    params = init_params(hidden_channels, kp)

    # Host-side precompute (hoisted out of the per-call path).
    a_hat_np = build_gcn_adjacency(edge_index, num_nodes)      # (N, N)
    pool_np = build_mean_pool(batch, num_nodes, num_graphs)    # (G, N)
    a_hat = jnp.asarray(a_hat_np)
    pool = jnp.asarray(pool_np)
    param_slab = pack_params({k: np.asarray(v) for k, v in params.items()},
                             hidden_channels)

    out = gmsnet_forward_batched(x_batched, a_hat, pool, param_slab,
                                 hidden_channels, num_graphs)
    out = jax.block_until_ready(out)
    assert out.shape == (batch_size, num_graphs, NUM_DIMENSIONS)

    # Correctness check against the pure-numpy reference, per batch instance.
    x_np = np.asarray(x_batched)
    ref = np.stack([
        gmsnet_reference_np(x_np[i], a_hat_np, pool_np, params, hidden_channels)
        for i in range(batch_size)
    ])
    assert np.allclose(np.asarray(out), ref, atol=1e-4, rtol=1e-4), (out, ref)

    print("KERNEL_OK")
</pallas_src>

<mosaic_0001>
module attributes {stable_mosaic.version = 11 : i64} {
  func.func @gmsnet_kernel(%arg0: i32, %arg1: memref<1x8x2xf32, #tpu.memory_space<vmem>>, %arg2: memref<8x8xf32, #tpu.memory_space<vmem>>, %arg3: memref<2x8xf32, #tpu.memory_space<vmem>>, %arg4: memref<48x128xf32, #tpu.memory_space<vmem>>, %arg5: memref<1x2x128xf32, #tpu.memory_space<vmem>>) attributes {dimension_semantics = [#tpu.dimension_semantics<parallel>], iteration_bounds = array<i64: 4>, scalar_prefetch = 0 : i64, scratch_operands = 0 : i64, tpu.core_type = #tpu.core_type<tc>, window_params = [{transform_indices = @transform_0, window_bounds = array<i64: 1, 8, 2>}, {pipeline_mode = #tpu.pipeline_mode<synchronous>, transform_indices = @transform_1, window_bounds = array<i64: 8, 8>}, {pipeline_mode = #tpu.pipeline_mode<synchronous>, transform_indices = @transform_2, window_bounds = array<i64: 2, 8>}, {pipeline_mode = #tpu.pipeline_mode<synchronous>, transform_indices = @transform_3, window_bounds = array<i64: 48, 128>}, {transform_indices = @transform_4, window_bounds = array<i64: 1, 2, 128>}]} {
    %c0 = arith.constant 0 : index
    %c0_0 = arith.constant 0 : index
    %c0_1 = arith.constant 0 : index
    %0 = vector.load %arg1[%c0, %c0_0, %c0_1] : memref<1x8x2xf32, #tpu.memory_space<vmem>>, vector<1x8x2xf32>
    %1 = vector.shape_cast %0 : vector<1x8x2xf32> to vector<8x2xf32>
    %c0_2 = arith.constant 0 : index
    %c0_3 = arith.constant 0 : index
    %2 = vector.load %arg4[%c0_2, %c0_3] : memref<48x128xf32, #tpu.memory_space<vmem>>, vector<2x2xf32>
    %c2 = arith.constant 2 : index
    %c0_4 = arith.constant 0 : index
    %3 = vector.load %arg4[%c2, %c0_4] : memref<48x128xf32, #tpu.memory_space<vmem>>, vector<2x2xf32>
    %c11 = arith.constant 11 : index
    %c0_5 = arith.constant 0 : index
    %4 = vector.load %arg4[%c11, %c0_5] : memref<48x128xf32, #tpu.memory_space<vmem>>, vector<2x32xf32>
    %c4 = arith.constant 4 : index
    %c0_6 = arith.constant 0 : index
    %5 = vector.load %arg4[%c4, %c0_6] : memref<48x128xf32, #tpu.memory_space<vmem>>, vector<1x2xf32>
    %c5 = arith.constant 5 : index
    %c0_7 = arith.constant 0 : index
    %6 = vector.load %arg4[%c5, %c0_7] : memref<48x128xf32, #tpu.memory_space<vmem>>, vector<1x2xf32>
    %c9 = arith.constant 9 : index
    %c0_8 = arith.constant 0 : index
    %7 = vector.load %arg4[%c9, %c0_8] : memref<48x128xf32, #tpu.memory_space<vmem>>, vector<1x32xf32>
    %c6 = arith.constant 6 : index
    %c0_9 = arith.constant 0 : index
    %8 = vector.load %arg4[%c6, %c0_9] : memref<48x128xf32, #tpu.memory_space<vmem>>, vector<1x2xf32>
    %c7 = arith.constant 7 : index
    %c0_10 = arith.constant 0 : index
    %9 = vector.load %arg4[%c7, %c0_10] : memref<48x128xf32, #tpu.memory_space<vmem>>, vector<1x2xf32>
    %c8 = arith.constant 8 : index
    %c0_11 = arith.constant 0 : index
    %10 = vector.load %arg4[%c8, %c0_11] : memref<48x128xf32, #tpu.memory_space<vmem>>, vector<1x2xf32>
    %c16 = arith.constant 16 : index
    %c0_12 = arith.constant 0 : index
    %11 = vector.load %arg4[%c16, %c0_12] : memref<48x128xf32, #tpu.memory_space<vmem>>, vector<32x128xf32>
    %c10 = arith.constant 10 : index
    %c0_13 = arith.constant 0 : index
    %12 = vector.load %arg4[%c10, %c0_13] : memref<48x128xf32, #tpu.memory_space<vmem>>, vector<1x128xf32>
    %13 = vector.extract_strided_slice %1 {offsets = [0, 0], sizes = [8, 1], strides = [1, 1]} : vector<8x2xf32> to vector<8x1xf32>
    %14 = vector.extract_strided_slice %2 {offsets = [0, 0], sizes = [1, 2], strides = [1, 1]} : vector<2x2xf32> to vector<1x2xf32>
    %15 = vector.broadcast %13 : vector<8x1xf32> to vector<8x2xf32>
    %16 = vector.broadcast %14 : vector<1x2xf32> to vector<8x2xf32>
    %17 = arith.mulf %15, %16 : vector<8x2xf32>
    %18 = vector.broadcast %5 : vector<1x2xf32> to vector<8x2xf32>
    %19 = arith.addf %18, %17 : vector<8x2xf32>
    %20 = vector.extract_strided_slice %1 {offsets = [0, 1], sizes = [8, 1], strides = [1, 1]} : vector<8x2xf32> to vector<8x1xf32>
    %21 = vector.extract_strided_slice %2 {offsets = [1, 0], sizes = [1, 2], strides = [1, 1]} : vector<2x2xf32> to vector<1x2xf32>
    %22 = vector.broadcast %20 : vector<8x1xf32> to vector<8x2xf32>
    %23 = vector.broadcast %21 : vector<1x2xf32> to vector<8x2xf32>
    %24 = arith.mulf %22, %23 : vector<8x2xf32>
    %25 = arith.addf %19, %24 : vector<8x2xf32>
    %cst = arith.constant dense<0.000000e+00> : vector<2xf32>
    %26 = vector.multi_reduction <add>, %25, %cst [0] : vector<8x2xf32> to vector<2xf32>
    %27 = vector.shape_cast %26 : vector<2xf32> to vector<1x2xf32>
    %cst_14 = arith.constant 8.000000e+00 : f32
    %28 = vector.broadcast %cst_14 : f32 to vector<1x2xf32>
    %29 = arith.divf %27, %28 : vector<1x2xf32>
    %30 = arith.mulf %29, %10 : vector<1x2xf32>
    %31 = vector.broadcast %30 : vector<1x2xf32> to vector<8x2xf32>
    %32 = arith.subf %25, %31 : vector<8x2xf32>
    %33 = arith.mulf %32, %32 : vector<8x2xf32>
    %cst_15 = arith.constant dense<0.000000e+00> : vector<2xf32>
    %34 = vector.multi_reduction <add>, %33, %cst_15 [0] : vector<8x2xf32> to vector<2xf32>
    %35 = vector.shape_cast %34 : vector<2xf32> to vector<1x2xf32>
    %cst_16 = arith.constant 8.000000e+00 : f32
    %36 = vector.broadcast %cst_16 : f32 to vector<1x2xf32>
    %37 = arith.divf %35, %36 : vector<1x2xf32>
    %38 = vector.broadcast %8 : vector<1x2xf32> to vector<8x2xf32>
    %39 = arith.mulf %38, %32 : vector<8x2xf32>
    %cst_17 = arith.constant 2.000000e+00 : f32
    %40 = vector.broadcast %cst_17 : f32 to vector<1x2xf32>
    %41 = arith.addf %37, %40 : vector<1x2xf32>
    %42 = math.rsqrt %41 : vector<1x2xf32>
    %43 = vector.broadcast %42 : vector<1x2xf32> to vector<8x2xf32>
    %44 = arith.mulf %39, %43 : vector<8x2xf32>
    %45 = vector.broadcast %9 : vector<1x2xf32> to vector<8x2xf32>
    %46 = arith.addf %44, %45 : vector<8x2xf32>
    %cst_18 = arith.constant 0.000000e+00 : f32
    %47 = vector.broadcast %cst_18 : f32 to vector<8x2xf32>
    %48 = arith.maximumf %46, %47 : vector<8x2xf32>
    %49 = vector.extract_strided_slice %48 {offsets = [0, 0], sizes = [8, 1], strides = [1, 1]} : vector<8x2xf32> to vector<8x1xf32>
    %50 = vector.extract_strided_slice %3 {offsets = [0, 0], sizes = [1, 2], strides = [1, 1]} : vector<2x2xf32> to vector<1x2xf32>
    %51 = vector.broadcast %49 : vector<8x1xf32> to vector<8x2xf32>
    %52 = vector.broadcast %50 : vector<1x2xf32> to vector<8x2xf32>
    %53 = arith.mulf %51, %52 : vector<8x2xf32>
    %54 = vector.extract_strided_slice %48 {offsets = [0, 1], sizes = [8, 1], strides = [1, 1]} : vector<8x2xf32> to vector<8x1xf32>
    %55 = vector.extract_strided_slice %3 {offsets = [1, 0], sizes = [1, 2], strides = [1, 1]} : vector<2x2xf32> to vector<1x2xf32>
    %56 = vector.broadcast %54 : vector<8x1xf32> to vector<8x2xf32>
    %57 = vector.broadcast %55 : vector<1x2xf32> to vector<8x2xf32>
    %58 = arith.mulf %56, %57 : vector<8x2xf32>
    %59 = arith.addf %53, %58 : vector<8x2xf32>
    %c0_19 = arith.constant 0 : index
    %c0_20 = arith.constant 0 : index
    %60 = vector.load %arg2[%c0_19, %c0_20] : memref<8x8xf32, #tpu.memory_space<vmem>>, vector<8x8xf32>
    %cst_21 = arith.constant dense<0.000000e+00> : vector<8x2xf32>
    %61 = tpu.matmul %60, %59, %cst_21 {dimension_numbers = #tpu.dot_dimension_numbers<[1], [0], [0], [1], [0, 0, 1, 1], [], []>} : vector<8x8xf32>, vector<8x2xf32>, vector<8x2xf32> -> vector<8x2xf32>
    %62 = vector.broadcast %6 : vector<1x2xf32> to vector<8x2xf32>
    %63 = arith.addf %61, %62 : vector<8x2xf32>
    %64 = arith.addf %63, %48 : vector<8x2xf32>
    %65 = vector.extract_strided_slice %64 {offsets = [0, 0], sizes = [8, 1], strides = [1, 1]} : vector<8x2xf32> to vector<8x1xf32>
    %66 = vector.extract_strided_slice %4 {offsets = [0, 0], sizes = [1, 32], strides = [1, 1]} : vector<2x32xf32> to vector<1x32xf32>
    %67 = vector.broadcast %65 : vector<8x1xf32> to vector<8x32xf32>
    %68 = vector.broadcast %66 : vector<1x32xf32> to vector<8x32xf32>
    %69 = arith.mulf %67, %68 : vector<8x32xf32>
    %70 = vector.broadcast %7 : vector<1x32xf32> to vector<8x32xf32>
    %71 = arith.addf %70, %69 : vector<8x32xf32>
    %72 = vector.extract_strided_slice %64 {offsets = [0, 1], sizes = [8, 1], strides = [1, 1]} : vector<8x2xf32> to vector<8x1xf32>
    %73 = vector.extract_strided_slice %4 {offsets = [1, 0], sizes = [1, 32], strides = [1, 1]} : vector<2x32xf32> to vector<1x32xf32>
    %74 = vector.broadcast %72 : vector<8x1xf32> to vector<8x32xf32>
    %75 = vector.broadcast %73 : vector<1x32xf32> to vector<8x32xf32>
    %76 = arith.mulf %74, %75 : vector<8x32xf32>
    %77 = arith.addf %71, %76 : vector<8x32xf32>
    %cst_22 = arith.constant dense<0.000000e+00> : vector<8xf32>
    %78 = vector.multi_reduction <add>, %77, %cst_22 [1] : vector<8x32xf32> to vector<8xf32>
    %79 = vector.shape_cast %78 : vector<8xf32> to vector<8x1xf32>
    %cst_23 = arith.constant 3.200000e+01 : f32
    %80 = vector.broadcast %cst_23 : f32 to vector<8x1xf32>
    %81 = arith.divf %79, %80 : vector<8x1xf32>
    %82 = vector.broadcast %81 : vector<8x1xf32> to vector<8x32xf32>
    %83 = arith.subf %77, %82 : vector<8x32xf32>
    %84 = arith.mulf %83, %83 : vector<8x32xf32>
    %cst_24 = arith.constant dense<0.000000e+00> : vector<8xf32>
    %85 = vector.multi_reduction <add>, %84, %cst_24 [1] : vector<8x32xf32> to vector<8xf32>
    %86 = vector.shape_cast %85 : vector<8xf32> to vector<8x1xf32>
    %cst_25 = arith.constant 3.200000e+01 : f32
    %87 = vector.broadcast %cst_25 : f32 to vector<8x1xf32>
    %88 = arith.divf %86, %87 : vector<8x1xf32>
    %cst_26 = arith.constant 3.200000e+01 : f32
    %89 = vector.broadcast %cst_26 : f32 to vector<8x1xf32>
    %90 = arith.addf %88, %89 : vector<8x1xf32>
    %91 = math.rsqrt %90 : vector<8x1xf32>
    %92 = vector.broadcast %91 : vector<8x1xf32> to vector<8x32xf32>
    %93 = arith.mulf %83, %92 : vector<8x32xf32>
    %c0_27 = arith.constant 0 : index
    %c0_28 = arith.constant 0 : index
    %94 = vector.load %arg3[%c0_27, %c0_28] : memref<2x8xf32, #tpu.memory_space<vmem>>, vector<2x8xf32>
    %cst_29 = arith.constant dense<0.000000e+00> : vector<2x32xf32>
    %95 = tpu.matmul %94, %93, %cst_29 {dimension_numbers = #tpu.dot_dimension_numbers<[1], [0], [0], [1], [0, 0, 1, 1], [], []>} : vector<2x8xf32>, vector<8x32xf32>, vector<2x32xf32> -> vector<2x32xf32>
    %cst_30 = arith.constant dense<0.000000e+00> : vector<2x128xf32>
    %96 = tpu.matmul %95, %11, %cst_30 {dimension_numbers = #tpu.dot_dimension_numbers<[1], [0], [0], [1], [0, 0, 1, 1], [], []>} : vector<2x32xf32>, vector<32x128xf32>, vector<2x128xf32> -> vector<2x128xf32>
    %97 = vector.broadcast %12 : vector<1x128xf32> to vector<2x128xf32>
    %98 = arith.addf %96, %97 : vector<2x128xf32>
    %c0_31 = arith.constant 0 : index
    %c0_32 = arith.constant 0 : index
    %c0_33 = arith.constant 0 : index
    %99 = vector.load %arg5[%c0_31, %c0_32, %c0_33] : memref<1x2x128xf32, #tpu.memory_space<vmem>>, vector<1x2x128xf32>
    %100 = vector.shape_cast %99 : vector<1x2x128xf32> to vector<2x128xf32>
    %101 = vector.shape_cast %98 : vector<2x128xf32> to vector<1x2x128xf32>
    tpu.vector_store %arg5[%c0_31, %c0_32, %c0_33], %101 {strides = array<i32>} : memref<1x2x128xf32, #tpu.memory_space<vmem>>, vector<1x2x128xf32>,
    return
  }
  func.func @transform_0(%arg0: i32) -> (i32, i32, i32) {
    %c0_i32 = arith.constant 0 : i32
    %c0_i32_0 = arith.constant 0 : i32
    %c0_i32_1 = arith.constant 0 : i32
    return %arg0, %c0_i32, %c0_i32_0 : i32, i32, i32
  }
  func.func @transform_1(%arg0: i32) -> (i32, i32) {
    %c0_i32 = arith.constant 0 : i32
    %c0_i32_0 = arith.constant 0 : i32
    %c0_i32_1 = arith.constant 0 : i32
    return %c0_i32, %c0_i32_0 : i32, i32
  }
  func.func @transform_2(%arg0: i32) -> (i32, i32) {
    %c0_i32 = arith.constant 0 : i32
    %c0_i32_0 = arith.constant 0 : i32
    %c0_i32_1 = arith.constant 0 : i32
    return %c0_i32, %c0_i32_0 : i32, i32
  }
  func.func @transform_3(%arg0: i32) -> (i32, i32) {
    %c0_i32 = arith.constant 0 : i32
    %c0_i32_0 = arith.constant 0 : i32
    %c0_i32_1 = arith.constant 0 : i32
    return %c0_i32, %c0_i32_0 : i32, i32
  }
  func.func @transform_4(%arg0: i32) -> (i32, i32, i32) {
    %c0_i32 = arith.constant 0 : i32
    %c0_i32_0 = arith.constant 0 : i32
    %c0_i32_1 = arith.constant 0 : i32
    return %arg0, %c0_i32, %c0_i32_0 : i32, i32, i32
  }
}

</mosaic_0001>

<llo_original>
// kernel: tpu_custom_call.1
$region0: #{tpu_custom_call.1}
  #allocation0 [shape = 'u32[]', space=smem, size = 0x4, offset = 0x4, fixed_abs, tag = 'smem constant byte address 0x4 - core index']
  #allocation1 [shape = 'u32[144,128]{1,0:T(1,128)}', space=vmem, size = 0x12000, scoped, tag = 'internal scratch']
  %s0 = inlined_call_operand.vmem [shape: f32[4,8,2], index: 0, kind: input, shape index: {}]
  %s1 = inlined_call_operand.hbm [shape: f32[8,8], index: 1, kind: input, shape index: {}]
  %s2 = inlined_call_operand.vmem [shape: f32[2,8], index: 2, kind: input, shape index: {}]
  %s3 = inlined_call_operand.vmem [shape: f32[48,128], index: 3, kind: input, shape index: {}]
  %s4 = inlined_call_operand.hbm [shape: f32[4,2,128], index: 4, kind: output, shape index: {}]
  %s5 = sld [smem:[#allocation0]]
  $region53: #{tpu_custom_call.1} parent=0
    _
  %s7 = ssub.s32 1, %s5
  %s8 = scalar_select 0, %s7, %s5
  $region1: #{tpu_custom_call.1} parent=0
    #allocation2 [shape = 'u8[4096]{0}', space=vmem, size = 0x1000, scoped, tag = 'input window, operand 1, single buffered']
    #allocation3 [shape = 's32[2]{0}', space=sflag, size = 0x8, scoped, tag = 'scoped memory for tpu_custom_call.1']
    #allocation4 [shape = 's32[2]{0}', space=sflag, size = 0x8, scoped, tag = 'scoped memory for tpu_custom_call.1']
    #allocation5 [shape = 'u8[2048]{0}', space=vmem, size = 0x800, scoped, tag = 'output window, operand 0']
    %9 = vsyncpa [#allocation3], 0
    %10 = vsyncpa [#allocation4], 0
    %s11 = scalar_lea.sflag [#allocation4], 1
    %12 = vsyncpa %s11, 0
    loop: start=0, step=1, limit=6
    $region2: #{tpu_custom_call.1} parent=1 // loop_pre_header
      _
    $region3: #{tpu_custom_call.1} parent=1 // loop_header
      %s14 = sphi 0, %s18
      %p15 = scmp.ge.s32.totalorder %s14, 6
      %s24 = sphi 0, %s26
      %s27 = sphi 0, %s24
      %s28 = sphi 0, %s27
      %s44 = sphi 0, %s28
      %s48 = sphi 0, %s48
      %s50 = sphi 0, %s48
      %s51 = sphi 0, %s50
      %s65 = sphi 0, %s51
      %s69 = sphi 0, %s69
      %s71 = sphi 0, %s69
      %s72 = sphi 0, %s71
      %s86 = sphi 0, %s72
      %s90 = sphi 0, %s90
      %s92 = sphi 0, %s90
      %s93 = sphi 0, %s92
      %s107 = sphi 0, %s93
      %s113 = sphi 0, %s115
      %s116 = sphi 0, %s113
      %s117 = sphi 0, %s116
      %s133 = sphi 0, %s117
    $region4: #{tpu_custom_call.1} parent=1 // loop_header_branch
      %17 = sbr.rel (%p15) target = $region8
    $region5: #{tpu_custom_call.1} parent=1 // loop_body
      %s19 = ssub.s32 %s14, 1
      %s20 = ssub.s32 %s14, 2
      %s21 = sadd.s32 %s14, 1
      %s22 = ssub.s32 %s14, %s21
      %p23 = scmp.eq.s32.totalorder %s22, 0
      %s25 = sadd.s32 %s24, 1
      %s26 = scalar_select %p23, %s24, %s25
      %p29 = pneg %p23
      %p30 = scmp.eq.s32.totalorder %s14, 3
      %p31 = por %p29, %p30
      %p32 = scmp.ne.s32.totalorder %s24, %s27
      %p33 = scmp.eq.s32.totalorder %s14, 0
      %p34 = por %p32, %p33
      %p35 = scmp.ne.s32.totalorder %s24, %s27
      %p36 = scmp.eq.s32.totalorder %s19, 3
      %p37 = por %p35, %p36
      %p38 = scmp.ne.s32.totalorder %s27, %s28
      %p39 = scmp.eq.s32.totalorder %s19, 0
      %p40 = por %p38, %p39
      %p41 = scmp.ne.s32.totalorder %s27, %s28
      %p42 = scmp.eq.s32.totalorder %s20, 3
      %p43 = por %p41, %p42
      %p45 = scmp.ne.s32.totalorder %s28, %s44
      %p46 = scmp.eq.s32.totalorder %s20, 0
      %p47 = por %p45, %p46
      %s49 = sadd.s32 %s48, 1
      %p52 = scmp.eq.s32.totalorder %s14, 3
      %p53 = scmp.ne.s32.totalorder %s48, %s50
      %p54 = scmp.eq.s32.totalorder %s14, 0
      %p55 = por %p53, %p54
      %p56 = scmp.ne.s32.totalorder %s48, %s50
      %p57 = scmp.eq.s32.totalorder %s19, 3
      %p58 = por %p56, %p57
      %p59 = scmp.ne.s32.totalorder %s50, %s51
      %p60 = scmp.eq.s32.totalorder %s19, 0
      %p61 = por %p59, %p60
      %p62 = scmp.ne.s32.totalorder %s50, %s51
      %p63 = scmp.eq.s32.totalorder %s20, 3
      %p64 = por %p62, %p63
      %p66 = scmp.ne.s32.totalorder %s51, %s65
      %p67 = scmp.eq.s32.totalorder %s20, 0
      %p68 = por %p66, %p67
      %s70 = sadd.s32 %s69, 1
      %p73 = scmp.eq.s32.totalorder %s14, 3
      %p74 = scmp.ne.s32.totalorder %s69, %s71
      %p75 = scmp.eq.s32.totalorder %s14, 0
      %p76 = por %p74, %p75
      %p77 = scmp.ne.s32.totalorder %s69, %s71
      %p78 = scmp.eq.s32.totalorder %s19, 3
      %p79 = por %p77, %p78
      %p80 = scmp.ne.s32.totalorder %s71, %s72
      %p81 = scmp.eq.s32.totalorder %s19, 0
      %p82 = por %p80, %p81
      %p83 = scmp.ne.s32.totalorder %s71, %s72
      %p84 = scmp.eq.s32.totalorder %s20, 3
      %p85 = por %p83, %p84
      %p87 = scmp.ne.s32.totalorder %s72, %s86
      %p88 = scmp.eq.s32.totalorder %s20, 0
      %p89 = por %p87, %p88
      %s91 = sadd.s32 %s90, 1
      %p94 = scmp.eq.s32.totalorder %s14, 3
      %p95 = scmp.ne.s32.totalorder %s90, %s92
      %p96 = scmp.eq.s32.totalorder %s14, 0
      %p97 = por %p95, %p96
      %p98 = scmp.ne.s32.totalorder %s90, %s92
      %p99 = scmp.eq.s32.totalorder %s19, 3
      %p100 = por %p98, %p99
      %p101 = scmp.ne.s32.totalorder %s92, %s93
      %p102 = scmp.eq.s32.totalorder %s19, 0
      %p103 = por %p101, %p102
      %p104 = scmp.ne.s32.totalorder %s92, %s93
      %p105 = scmp.eq.s32.totalorder %s20, 3
      %p106 = por %p104, %p105
      %p108 = scmp.ne.s32.totalorder %s93, %s107
      %p109 = scmp.eq.s32.totalorder %s20, 0
      %p110 = por %p108, %p109
      %s111 = ssub.s32 %s14, %s21
      %p112 = scmp.eq.s32.totalorder %s111, 0
      %s114 = sadd.s32 %s113, 1
      %s115 = scalar_select %p112, %s113, %s114
      %p118 = pneg %p112
      %p119 = scmp.eq.s32.totalorder %s14, 3
      %p120 = por %p118, %p119
      %p121 = scmp.ne.s32.totalorder %s113, %s116
      %p122 = scmp.eq.s32.totalorder %s14, 0
      %p123 = por %p121, %p122
      %p124 = scmp.ne.s32.totalorder %s113, %s116
      %p125 = scmp.eq.s32.totalorder %s19, 3
      %p126 = por %p124, %p125
      %p127 = scmp.ne.s32.totalorder %s116, %s117
      %p128 = scmp.eq.s32.totalorder %s19, 0
      %p129 = por %p127, %p128
      %p130 = scmp.ne.s32.totalorder %s116, %s117
      %p131 = scmp.eq.s32.totalorder %s20, 3
      %p132 = por %p130, %p131
      %p134 = scmp.ne.s32.totalorder %s117, %s133
      %p135 = scmp.eq.s32.totalorder %s20, 0
      %p136 = por %p134, %p135
      %p137 = scmp.le.s32.totalorder 1, %s14
      %p138 = scmp.lt.s32.totalorder %s14, 5
      %p139 = pnand %p137, %p138
      %p140 = pneg %p139
      // Predicated region
      $region9: #{tpu_custom_call.1} parent=5 // pred_check
        _
      $region10: #{tpu_custom_call.1} parent=5 // pred_check_branch
        %142 = sbr.rel (%p139) target = $region12
      $region11: #{tpu_custom_call.1} parent=5 // pred_region
        %s143 = ssub.s32 %s14, 1
        // Predicated region
        $region13: #{tpu_custom_call.1} parent=11 // pred_check
          %p144 = pneg %p61
        $region14: #{tpu_custom_call.1} parent=11 // pred_check_branch
          %146 = sbr.rel (%p144) target = $region16
        $region15: #{tpu_custom_call.1} parent=11 // pred_region
          %s148 = ssub.s32 128, 128
          %149 = vsyncadd [#allocation3], %s148
          %s151 = sshll.u32 [#allocation2], 4
          %s152 = int_to_ptr.vmem [resolvable:$true] %s151
          %154 = dma.hbm_to_vmem [thread:$0]  %s1, 128, %s152, [#allocation3]
        $region16: #{tpu_custom_call.1} parent=11 // pred_fallthru
          _
        // Predicated region
        $region17: #{tpu_custom_call.1} parent=11 // pred_check
          %p155 = pneg %p82
        $region18: #{tpu_custom_call.1} parent=11 // pred_check_branch
          %157 = sbr.rel (%p155) target = $region20
        $region19: #{tpu_custom_call.1} parent=11 // pred_region
          _
        $region20: #{tpu_custom_call.1} parent=11 // pred_fallthru
          _
        // Predicated region
        $region21: #{tpu_custom_call.1} parent=11 // pred_check
          %p158 = pneg %p103
        $region22: #{tpu_custom_call.1} parent=11 // pred_check_branch
          %160 = sbr.rel (%p158) target = $region24
        $region23: #{tpu_custom_call.1} parent=11 // pred_region
          _
        $region24: #{tpu_custom_call.1} parent=11 // pred_fallthru
          _
      $region12: #{tpu_custom_call.1} parent=5 // pred_fallthru
        _
      %p161 = scmp.lt.s32.totalorder %s14, 4
      // Predicated region
      $region25: #{tpu_custom_call.1} parent=5 // pred_check
        %p162 = pneg %p161
      $region26: #{tpu_custom_call.1} parent=5 // pred_check_branch
        %164 = sbr.rel (%p162) target = $region28
      $region27: #{tpu_custom_call.1} parent=5 // pred_region
        // Predicated region
        $region29: #{tpu_custom_call.1} parent=27 // pred_check
          %p165 = pneg %p34
        $region30: #{tpu_custom_call.1} parent=27 // pred_check_branch
          %167 = sbr.rel (%p165) target = $region32
        $region31: #{tpu_custom_call.1} parent=27 // pred_region
          %p168 = scmp.lt.s32.totalorder %s14, 3
          %s169 = scalar_select %p168, %s14, 3
          %s170 = smul.addr %s169, 8
          %s171 = scalar_lea.vmem %s0, %s170
        $region32: #{tpu_custom_call.1} parent=27 // pred_fallthru
          _
      $region28: #{tpu_custom_call.1} parent=5 // pred_fallthru
        _
      %p172 = scmp.le.s32.totalorder 1, %s14
      %p173 = scmp.lt.s32.totalorder %s14, 5
      %p174 = pnand %p172, %p173
      %p175 = pneg %p174
      // Predicated region
      $region33: #{tpu_custom_call.1} parent=5 // pred_check
        _
      $region34: #{tpu_custom_call.1} parent=5 // pred_check_branch
        %177 = sbr.rel (%p174) target = $region36
      $region35: #{tpu_custom_call.1} parent=5 // pred_region
        %s178 = ssub.s32 %s14, 1
        // Predicated region
        $region37: #{tpu_custom_call.1} parent=35 // pred_check
          %p179 = pneg %p61
        $region38: #{tpu_custom_call.1} parent=35 // pred_check_branch
          %181 = sbr.rel (%p179) target = $region40
        $region39: #{tpu_custom_call.1} parent=35 // pred_region
          %182 = dma.done [#allocation3], 128
        $region40: #{tpu_custom_call.1} parent=35 // pred_fallthru
          _
        %p183 = scmp.lt.s32.totalorder %s19, 3
        %s184 = scalar_select %p183, %s19, 3
        %s185 = smul.addr %s184, 8
        %s186 = scalar_lea.vmem %s0, %s185
        %p187 = pneg %p40
        %p188 = pneg %p37
        %p189 = pneg %p61
        %p190 = pneg %p58
        %p191 = pneg %p82
        %p192 = pneg %p79
        %p193 = pneg %p103
        %p194 = pneg %p100
        %p195 = pneg %p129
        %p196 = pneg %p126
        %s197 = sand.u32 %s116, 1
        %s198 = scalar_lea.sflag [#allocation4], %s197
        %s199 = sand.u32 %s116, 1
        %s200 = smul.addr %s199, 2
        %s201 = scalar_lea.vmem [#allocation5], %s200
        %p202 = scmp.lt.s32.totalorder %s19, 3
        %s203 = scalar_select %p202, %s19, 3
        %s204 = smul.addr %s203, 8
        %s205 = scalar_lea.vmem %s0, %s204
        %v206 = vld [vmem:[%s205] sm:$0xff]
        %v207 = vld [vmem:[%s3] sm:$0x3]
        %v208 = vld [vmem:[%s3 + $0x2] sm:$0x3]
        %v209 = vld [vmem:[%s3 + $0xb] sm:$0x3]
        %v210 = vld [vmem:[%s3 + $0x4] sm:$0x1]
        %v211 = vld [vmem:[%s3 + $0x5] sm:$0x1]
        %v212 = vld [vmem:[%s3 + $0x9] sm:$0x1]
        %v213 = vld [vmem:[%s3 + $0x6] sm:$0x1]
        %v214 = vld [vmem:[%s3 + $0x7] sm:$0x1]
        %v215 = vld [vmem:[%s3 + $0x8] sm:$0x1]
        %v216 = vld [vmem:[%s3 + $0x10] sm:$0xff]
        %v217 = vld [vmem:[%s3 + $0x18] sm:$0xff]
        %v218 = vld [vmem:[%s3 + $0x20] sm:$0xff]
        %v219 = vld [vmem:[%s3 + $0x28] sm:$0xff]
        %v220 = vld [vmem:[%s3 + $0xa] sm:$0x1]
        %222 = vset.pattern.permute.xlu0 0
        %223 = vperm.xlu0 %222, %v206
        %v224 = vpop.permute.xlu0 %223
        %v226 = vlaneseq
        %v227 = vshrl.u32 %v226, 7
        %v228 = vsub.s32 0, %v227
        %v229 = vrot.slane %v207, %v228
        %v230 = vmul.f32 %v224, %v229
        %v231 = vlaneseq
        %v232 = vshrl.u32 %v231, 7
        %v233 = vsub.s32 0, %v232
        %v234 = vrot.slane %v210, %v233
        %v235 = vadd.f32 %v234, %v230
        %236 = vset.pattern.permute.xlu0 1
        %237 = vperm.xlu0 %236, %v206
        %v238 = vpop.permute.xlu0 %237
        %v240 = vlaneseq
        %v241 = vshrl.u32 %v240, 7
        %v242 = vsub.s32 1, %v241
        %v243 = vrot.slane %v207, %v242
        %v244 = vmul.f32 %v238, %v243
        %v245 = vadd.f32 %v235, %v244
        %vm246 = vcmask 15360
        %v247 = vsel %vm246, %v245, 0.0
        %v248 = vrot.slane %v247, 4
        %v249 = vadd.f32 %v247, %v248
        %v250 = vrot.slane %v249, 2
        %v251 = vadd.f32 %v249, %v250
        %v252 = vrot.slane %v251, 1
        %v253 = vadd.f32 %v251, %v252
        %v254 = vrcp.pop 8.0
        %v255 = vmul.f32 %v253, %v254
        %v256 = vmul.f32 %v255, %v215
        %v257 = vlaneseq
        %v258 = vshrl.u32 %v257, 7
        %v259 = vsub.s32 0, %v258
        %v260 = vrot.slane %v256, %v259
        %v261 = vsub.f32 %v245, %v260
        %v262 = vmul.f32 %v261, %v261
        %v263 = vsel %vm246, %v262, 0.0
        %v264 = vrot.slane %v263, 4
        %v265 = vadd.f32 %v263, %v264
        %v266 = vrot.slane %v265, 2
        %v267 = vadd.f32 %v265, %v266
        %v268 = vrot.slane %v267, 1
        %v269 = vadd.f32 %v267, %v268
        %v270 = vmul.f32 %v269, %v254
        %v271 = vlaneseq
        %v272 = vshrl.u32 %v271, 7
        %v273 = vsub.s32 0, %v272
        %v274 = vrot.slane %v213, %v273
        %v275 = vmul.f32 %v274, %v261
        %v276 = vadd.f32 %v270, 2.0
        %v277 = vrsqrt.pop %v276
        %v278 = vmul.f32 %v275, %v277
        %v279 = vlaneseq
        %v280 = vshrl.u32 %v279, 7
        %v281 = vsub.s32 0, %v280
        %v282 = vrot.slane %v214, %v281
        %v283 = vadd.f32 %v278, %v282
        %v284 = vmax.f32 %v283, 0.0
        %286 = vset.pattern.permute.xlu0 0
        %287 = vperm.xlu0 %286, %v284
        %v288 = vpop.permute.xlu0 %287
        %v290 = vlaneseq
        %v291 = vshrl.u32 %v290, 7
        %v292 = vsub.s32 0, %v291
        %v293 = vrot.slane %v208, %v292
        %v294 = vmul.f32 %v288, %v293
        %295 = vset.pattern.permute.xlu0 1
        %296 = vperm.xlu0 %295, %v284
        %v297 = vpop.permute.xlu0 %296
        %v299 = vlaneseq
        %v300 = vshrl.u32 %v299, 7
        %v301 = vsub.s32 1, %v300
        %v302 = vrot.slane %v208, %v301
        %v303 = vmul.f32 %v297, %v302
        %v304 = vadd.f32 %v294, %v303
        %v305 = vld [vmem:[#allocation2] sm:$0xff]
        %v306 = vlaneseq
        %v307 = vshrl.u32 %v306, 7
        %v308 = vsub.s32 0, %v307
        %v309 = vrot.slane %v211, %v308
        %vm310 = vcmask 64512
        %v312 = vsel %vm310, %v305, 0
        %314 = vmatprep.subr.mxu0 0.0
        %315 = vmatpush1.msra.mxu0 %v304
        %316 = vmatprep.subr.mxu0 0.0
        %317 = vmatpush1.msra.mxu0 0.0
        %318 = vmatprep.subr.mxu0 0.0
        %319 = vmatpush1.msra.mxu0 0.0
        %320 = vmatprep.subr.mxu0 0.0
        %321 = vmatpush1.msra.mxu0 0.0
        %322 = vmatprep.subr.mxu0 0.0
        %323 = vmatpush1.msra.mxu0 0.0
        %324 = vmatprep.subr.mxu0 0.0
        %325 = vmatpush1.msra.mxu0 0.0
        %326 = vmatprep.subr.mxu0 0.0
        %327 = vmatpush1.msra.mxu0 0.0
        %328 = vmatprep.subr.mxu0 0.0
        %329 = vmatpush1.msra.mxu0 0.0
        %330 = vmatprep.subr.mxu0 0.0
        %331 = vmatpush1.msra.mxu0 0.0
        %332 = vmatprep.subr.mxu0 0.0
        %333 = vmatpush1.msra.mxu0 0.0
        %334 = vmatprep.subr.mxu0 0.0
        %335 = vmatpush1.msra.mxu0 0.0
        %336 = vmatprep.subr.mxu0 0.0
        %337 = vmatpush1.msra.mxu0 0.0
        %338 = vmatprep.subr.mxu0 0.0
        %339 = vmatpush1.msra.mxu0 0.0
        %340 = vmatprep.subr.mxu0 0.0
        %341 = vmatpush1.msra.mxu0 0.0
        %342 = vmatprep.subr.mxu0 0.0
        %343 = vmatpush1.msra.mxu0 0.0
        %344 = vmatprep.subr.mxu0 0.0
        %345 = vmatpush1.msra.mxu0 0.0
        %346 = vmatprep.subr.mxu0 0.0
        %347 = vmatpush1.msra.mxu0 0.0
        %348 = vmatprep.subr.mxu0 0.0
        %349 = vmatpush1.msra.mxu0 0.0
        %350 = vmatprep.subr.mxu0 0.0
        %351 = vmatpush1.msra.mxu0 0.0
        %352 = vmatprep.subr.mxu0 0.0
        %353 = vmatpush1.msra.mxu0 0.0
        %354 = vmatprep.subr.mxu0 0.0
        %355 = vmatpush1.msra.mxu0 0.0
        %356 = vmatprep.subr.mxu0 0.0
        %357 = vmatpush1.msra.mxu0 0.0
        %358 = vmatprep.subr.mxu0 0.0
        %359 = vmatpush1.msra.mxu0 0.0
        %360 = vmatprep.subr.mxu0 0.0
        %361 = vmatpush1.msra.mxu0 0.0
        %362 = vmatprep.subr.mxu0 0.0
        %363 = vmatpush1.msra.mxu0 0.0
        %364 = vmatprep.subr.mxu0 0.0
        %365 = vmatpush1.msra.mxu0 0.0
        %366 = vmatprep.subr.mxu0 0.0
        %367 = vmatpush1.msra.mxu0 0.0
        %368 = vmatprep.subr.mxu0 0.0
        %369 = vmatpush1.msra.mxu0 0.0
        %370 = vmatprep.subr.mxu0 0.0
        %371 = vmatpush1.msra.mxu0 0.0
        %372 = vmatprep.subr.mxu0 0.0
        %373 = vmatpush1.msra.mxu0 0.0
        %374 = vmatprep.subr.mxu0 0.0
        %375 = vmatpush1.msra.mxu0 0.0
        %376 = vmatprep.subr.mxu0 0.0
        %377 = vmatpush1.msra.mxu0 0.0
        %378 = vmatprep.mubr.f32.mxu0 0.0
        %379 = vmatmul.mubr.f32.gmra.mrb[0].mxu0 %v312
        %v380 = vpop.f32.mrb[0].mxu0
        %v381 = vadd.f32 %v309, %v380
        %v382 = vpop.f32.mrb[0].mxu0
        %383 = vdwg.mxu0
        %v384 = vadd.f32 %v381, %v284
        %386 = vset.pattern.permute.xlu0 0
        %387 = vperm.xlu0 %386, %v384
        %v388 = vpop.permute.xlu0 %387
        %v390 = vlaneseq
        %v391 = vshrl.u32 %v390, 7
        %v392 = vsub.s32 0, %v391
        %v393 = vrot.slane %v209, %v392
        %v394 = vmul.f32 %v388, %v393
        %v395 = vlaneseq
        %v396 = vshrl.u32 %v395, 7
        %v397 = vsub.s32 0, %v396
        %v398 = vrot.slane %v212, %v397
        %v399 = vadd.f32 %v398, %v394
        %400 = vset.pattern.permute.xlu0 1
        %401 = vperm.xlu0 %400, %v384
        %v402 = vpop.permute.xlu0 %401
        %v404 = vlaneseq
        %v405 = vshrl.u32 %v404, 7
        %v406 = vsub.s32 1, %v405
        %v407 = vrot.slane %v209, %v406
        %v408 = vmul.f32 %v402, %v407
        %v409 = vadd.f32 %v399, %v408
        %vm410 = vcmask 261120
        %v411 = vsel %vm410, %v409, 0.0
        %412 = vadd.xlane.f32.xlu0 %v411
        %v413 = vpop.xlane.xlu0 %412
        %v414 = vrcp.pop 32.0
        %v415 = vmul.f32 %v413, %v414
        %v416 = vsub.f32 %v409, %v415
        %v417 = vmul.f32 %v416, %v416
        %v418 = vsel %vm410, %v417, 0.0
        %419 = vadd.xlane.f32.xlu0 %v418
        %v420 = vpop.xlane.xlu0 %419
        %v421 = vmul.f32 %v420, %v414
        %v422 = vadd.f32 %v421, 32.0
        %v423 = vrsqrt.pop %v422
        %v424 = vmul.f32 %v416, %v423
        %v425 = vld [vmem:[%s2] sm:$0x3]
        %v427 = vsel %vm310, %v425, 0
        %429 = vmatprep.subr.mxu0 0.0
        %430 = vmatpush1.msra.mxu0 %v424
        %431 = vmatprep.subr.mxu0 0.0
        %432 = vmatpush1.msra.mxu0 0.0
        %433 = vmatprep.subr.mxu0 0.0
        %434 = vmatpush1.msra.mxu0 0.0
        %435 = vmatprep.subr.mxu0 0.0
        %436 = vmatpush1.msra.mxu0 0.0
        %437 = vmatprep.subr.mxu0 0.0
        %438 = vmatpush1.msra.mxu0 0.0
        %439 = vmatprep.subr.mxu0 0.0
        %440 = vmatpush1.msra.mxu0 0.0
        %441 = vmatprep.subr.mxu0 0.0
        %442 = vmatpush1.msra.mxu0 0.0
        %443 = vmatprep.subr.mxu0 0.0
        %444 = vmatpush1.msra.mxu0 0.0
        %445 = vmatprep.subr.mxu0 0.0
        %446 = vmatpush1.msra.mxu0 0.0
        %447 = vmatprep.subr.mxu0 0.0
        %448 = vmatpush1.msra.mxu0 0.0
        %449 = vmatprep.subr.mxu0 0.0
        %450 = vmatpush1.msra.mxu0 0.0
        %451 = vmatprep.subr.mxu0 0.0
        %452 = vmatpush1.msra.mxu0 0.0
        %453 = vmatprep.subr.mxu0 0.0
        %454 = vmatpush1.msra.mxu0 0.0
        %455 = vmatprep.subr.mxu0 0.0
        %456 = vmatpush1.msra.mxu0 0.0
        %457 = vmatprep.subr.mxu0 0.0
        %458 = vmatpush1.msra.mxu0 0.0
        %459 = vmatprep.subr.mxu0 0.0
        %460 = vmatpush1.msra.mxu0 0.0
        %461 = vmatprep.subr.mxu0 0.0
        %462 = vmatpush1.msra.mxu0 0.0
        %463 = vmatprep.subr.mxu0 0.0
        %464 = vmatpush1.msra.mxu0 0.0
        %465 = vmatprep.subr.mxu0 0.0
        %466 = vmatpush1.msra.mxu0 0.0
        %467 = vmatprep.subr.mxu0 0.0
        %468 = vmatpush1.msra.mxu0 0.0
        %469 = vmatprep.subr.mxu0 0.0
        %470 = vmatpush1.msra.mxu0 0.0
        %471 = vmatprep.subr.mxu0 0.0
        %472 = vmatpush1.msra.mxu0 0.0
        %473 = vmatprep.subr.mxu0 0.0
        %474 = vmatpush1.msra.mxu0 0.0
        %475 = vmatprep.subr.mxu0 0.0
        %476 = vmatpush1.msra.mxu0 0.0
        %477 = vmatprep.subr.mxu0 0.0
        %478 = vmatpush1.msra.mxu0 0.0
        %479 = vmatprep.subr.mxu0 0.0
        %480 = vmatpush1.msra.mxu0 0.0
        %481 = vmatprep.subr.mxu0 0.0
        %482 = vmatpush1.msra.mxu0 0.0
        %483 = vmatprep.subr.mxu0 0.0
        %484 = vmatpush1.msra.mxu0 0.0
        %485 = vmatprep.subr.mxu0 0.0
        %486 = vmatpush1.msra.mxu0 0.0
        %487 = vmatprep.subr.mxu0 0.0
        %488 = vmatpush1.msra.mxu0 0.0
        %489 = vmatprep.subr.mxu0 0.0
        %490 = vmatpush1.msra.mxu0 0.0
        %491 = vmatprep.subr.mxu0 0.0
        %492 = vmatpush1.msra.mxu0 0.0
        %493 = vmatprep.mubr.f32.mxu0 0.0
        %494 = vmatmul.mubr.f32.gmra.mrb[0].mxu0 %v427
        %v495 = vpop.f32.mrb[0].mxu0
        %v496 = vadd.f32 0.0, %v495
        %v497 = vpop.f32.mrb[0].mxu0
        %498 = vdwg.mxu0
        %v499 = vlaneseq
        %v500 = vshrl.u32 %v499, 7
        %v501 = vsub.s32 0, %v500
        %v502 = vrot.slane %v220, %v501
        %v504 = vsel %vm410, %v496, 0
        %506 = vmatprep.subr.mxu0 0.0
        %507 = vmatpush1.msra.mxu0 %v216
        %508 = vmatprep.subr.mxu0 0.0
        %509 = vmatpush1.msra.mxu0 %v217
        %510 = vmatprep.subr.mxu0 0.0
        %511 = vmatpush1.msra.mxu0 %v218
        %512 = vmatprep.subr.mxu0 0.0
        %513 = vmatpush1.msra.mxu0 %v219
        %514 = vmatprep.subr.mxu0 0.0
        %515 = vmatpush1.msra.mxu0 0.0
        %516 = vmatprep.subr.mxu0 0.0
        %517 = vmatpush1.msra.mxu0 0.0
        %518 = vmatprep.subr.mxu0 0.0
        %519 = vmatpush1.msra.mxu0 0.0
        %520 = vmatprep.subr.mxu0 0.0
        %521 = vmatpush1.msra.mxu0 0.0
        %522 = vmatprep.subr.mxu0 0.0
        %523 = vmatpush1.msra.mxu0 0.0
        %524 = vmatprep.subr.mxu0 0.0
        %525 = vmatpush1.msra.mxu0 0.0
        %526 = vmatprep.subr.mxu0 0.0
        %527 = vmatpush1.msra.mxu0 0.0
        %528 = vmatprep.subr.mxu0 0.0
        %529 = vmatpush1.msra.mxu0 0.0
        %530 = vmatprep.subr.mxu0 0.0
        %531 = vmatpush1.msra.mxu0 0.0
        %532 = vmatprep.subr.mxu0 0.0
        %533 = vmatpush1.msra.mxu0 0.0
        %534 = vmatprep.subr.mxu0 0.0
        %535 = vmatpush1.msra.mxu0 0.0
        %536 = vmatprep.subr.mxu0 0.0
        %537 = vmatpush1.msra.mxu0 0.0
        %538 = vmatprep.subr.mxu0 0.0
        %539 = vmatpush1.msra.mxu0 0.0
        %540 = vmatprep.subr.mxu0 0.0
        %541 = vmatpush1.msra.mxu0 0.0
        %542 = vmatprep.subr.mxu0 0.0
        %543 = vmatpush1.msra.mxu0 0.0
        %544 = vmatprep.subr.mxu0 0.0
        %545 = vmatpush1.msra.mxu0 0.0
        %546 = vmatprep.subr.mxu0 0.0
        %547 = vmatpush1.msra.mxu0 0.0
        %548 = vmatprep.subr.mxu0 0.0
        %549 = vmatpush1.msra.mxu0 0.0
        %550 = vmatprep.subr.mxu0 0.0
        %551 = vmatpush1.msra.mxu0 0.0
        %552 = vmatprep.subr.mxu0 0.0
        %553 = vmatpush1.msra.mxu0 0.0
        %554 = vmatprep.subr.mxu0 0.0
        %555 = vmatpush1.msra.mxu0 0.0
        %556 = vmatprep.subr.mxu0 0.0
        %557 = vmatpush1.msra.mxu0 0.0
        %558 = vmatprep.subr.mxu0 0.0
        %559 = vmatpush1.msra.mxu0 0.0
        %560 = vmatprep.subr.mxu0 0.0
        %561 = vmatpush1.msra.mxu0 0.0
        %562 = vmatprep.subr.mxu0 0.0
        %563 = vmatpush1.msra.mxu0 0.0
        %564 = vmatprep.subr.mxu0 0.0
        %565 = vmatpush1.msra.mxu0 0.0
        %566 = vmatprep.subr.mxu0 0.0
        %567 = vmatpush1.msra.mxu0 0.0
        %568 = vmatprep.subr.mxu0 0.0
        %569 = vmatpush1.msra.mxu0 0.0
        %570 = vmatprep.mubr.f32.mxu0 0.0
        %571 = vmatmul.mubr.f32.gmra.mrb[0].mxu0 %v504
        %v572 = vpop.f32.mrb[0].mxu0
        %v573 = vadd.f32 %v502, %v572
        %v574 = vpop.f32.mrb[0].mxu0
        %575 = vdwg.mxu0
        %576 = vst [vmem:[%s201] sm:$0x3] %v573
        %s577 = sand.u32 %s116, 1
        %s578 = scalar_lea.sflag [#allocation4], %s577
        %s579 = sand.u32 %s116, 1
        %s580 = smul.addr %s579, 2
        %s581 = scalar_lea.vmem [#allocation5], %s580
        // Predicated region
        $region41: #{tpu_custom_call.1} parent=35 // pred_check
          %p582 = pneg %p126
        $region42: #{tpu_custom_call.1} parent=35 // pred_check_branch
          %584 = sbr.rel (%p582) target = $region44
        $region43: #{tpu_custom_call.1} parent=35 // pred_region
          %s586 = ssub.s32 32, 32
          %587 = vsyncadd %s578, %s586
          %s588 = smul.addr %s19, 32
          %s589 = scalar_lea.hbm %s4, %s588
          %s591 = sshll.u32 %s581, 4
          %s592 = int_to_ptr.vmem [resolvable:$true] %s591
          %594 = dma.vmem_to_hbm [thread:$0]  %s592, 32, %s589, %s578
        $region44: #{tpu_custom_call.1} parent=35 // pred_fallthru
          _
      $region36: #{tpu_custom_call.1} parent=5 // pred_fallthru
        _
      %p595 = scmp.le.s32.totalorder 2, %s14
      // Predicated region
      $region45: #{tpu_custom_call.1} parent=5 // pred_check
        %p596 = pneg %p595
      $region46: #{tpu_custom_call.1} parent=5 // pred_check_branch
        %598 = sbr.rel (%p596) target = $region48
      $region47: #{tpu_custom_call.1} parent=5 // pred_region
        %s599 = ssub.s32 %s14, 2
        // Predicated region
        $region49: #{tpu_custom_call.1} parent=47 // pred_check
          %p600 = pneg %p132
        $region50: #{tpu_custom_call.1} parent=47 // pred_check_branch
          %602 = sbr.rel (%p600) target = $region52
        $region51: #{tpu_custom_call.1} parent=47 // pred_region
          %s603 = sand.u32 %s117, 1
          %s604 = scalar_lea.sflag [#allocation4], %s603
          %s605 = sand.u32 %s117, 1
          %s606 = smul.addr %s605, 2
          %s607 = scalar_lea.vmem [#allocation5], %s606
          %608 = dma.done %s604, 32
        $region52: #{tpu_custom_call.1} parent=47 // pred_fallthru
          _
      $region48: #{tpu_custom_call.1} parent=5 // pred_fallthru
        _
    $region6: #{tpu_custom_call.1} parent=1 // loop_footer
      %s18 = sadd.s32 1, %s14
    $region7: #{tpu_custom_call.1} parent=1 // loop_footer_branch
      %13 = sbr.rel target = $region3
    $region8: #{tpu_custom_call.1} parent=1 // loop_exit
      _
    %609 = vsyncpa [#allocation3], 1
    %s610 = scalar_lea.sflag [#allocation3], 1
    %611 = vsyncpa %s610, 1
    %612 = vsyncpa [#allocation4], 1
    %s613 = scalar_lea.sflag [#allocation4], 1
    %614 = vsyncpa %s613, 1

</llo_original>
